<compile_context>
chip_gen: v6e
topology: v6e:2x2x1
jax: 0.10.0
libtpu: 0.0.40
codegen_flags: <defaults>
</compile_context>

<pallas_src>
import functools

import jax
import jax.numpy as jnp
from jax import lax
from jax.experimental import pallas as pl
from jax.experimental.pallas import tpu as pltpu

_LANES = 128
_MAX_ROW_TILE = 4096   # 4096x128 f32 = 2 MiB per input per pipeline buffer
_MIN_SPLIT_ROWS = 512  # don't split into multiple grid steps below ~256 KiB blocks


def _cdiv(a, b):
    return -(-a // b)


def _round_up(a, m):
    return _cdiv(a, m) * m


def _kl_kernel(mean_ref, logsig_ref, out_ref, *, row_tile, valid_rows, needs_mask):
    # Cast inside the kernel (VPU, hidden under DMA); compute in f32.
    zm = mean_ref[...].astype(jnp.float32)
    zlv = logsig_ref[...].astype(jnp.float32) * 2.0          # z_log_var = 2 * z_log_sigma
    if needs_mask:
        # The last grid step may read past the logical end of the (rows, 128) view
        # (Pallas pads boundary blocks with unspecified data). Zero invalid rows so
        # they contribute exactly 0 (0^2 + e^0 - 0 - 1 = 0). ~3 VALU ops/elem: free.
        row = pl.program_id(0) * row_tile + lax.broadcasted_iota(
            jnp.int32, (row_tile, _LANES), 0)
        valid = row < valid_rows
        zm = jnp.where(valid, zm, 0.0)
        zlv = jnp.where(valid, zlv, 0.0)
    term = zm * zm + jnp.exp(zlv) - zlv - 1.0                 # VPU + EUP hot path
    # (8,128)-aligned lane-dense partial: group sublanes and reduce with pure VALU
    # adds across vregs -> clean unmasked 4 KiB store per grid step.
    out_ref[...] = jnp.sum(term.reshape(row_tile // 8, 8, _LANES), axis=0)


def _kl_sum_ref(z_mean, z_log_sigma):
    zm = z_mean.astype(jnp.float32)
    zlv = z_log_sigma.astype(jnp.float32) * 2.0
    return jnp.sum(zm * zm + jnp.exp(zlv) - zlv - 1.0)


def kl_divergence(z_mean, z_log_sigma):
    assert z_mean.shape == z_log_sigma.shape
    assert z_mean.dtype == z_log_sigma.dtype
    n = int(z_mean.size)
    itemsize = jnp.dtype(z_mean.dtype).itemsize
    pack = max(8, 32 // itemsize)          # sublane packing: f32->8, bf16->16, i8/fp8->32

    zm = jnp.ravel(z_mean)
    zs = jnp.ravel(z_log_sigma)

    # Lane alignment: kernel works on a lane-dense (rows, 128) view, which needs
    # n % 128 == 0. Any sub-row remainder (< 128 elems) is summed in plain JAX.
    tail = jnp.float32(0.0)
    rem = n % _LANES
    if rem:
        tail = _kl_sum_ref(zm[n - rem:], zs[n - rem:])
        zm, zs = zm[: n - rem], zs[: n - rem]
        n -= rem
    if n == 0:
        return 0.5 * tail

    rows = n // _LANES
    zm = zm.reshape(rows, _LANES)
    zs = zs.reshape(rows, _LANES)

    # Tile selection: big blocks to amortize per-grid-step overhead (HBM-bandwidth
    # bound), even block count so the "parallel" axis keeps both TCs busy, rounded
    # to the dtype's sublane packing.
    rows_r = _round_up(rows, pack)
    if rows_r <= 2 * _MIN_SPLIT_ROWS:
        row_tile = rows_r
        num_blocks = 1
    else:
        num_blocks = max(2, _round_up(_cdiv(rows_r, _MAX_ROW_TILE), 2))
        row_tile = _round_up(_cdiv(rows_r, num_blocks), pack)
        num_blocks = _cdiv(rows_r, row_tile)
    needs_mask = (num_blocks * row_tile) != rows

    kernel = functools.partial(_kl_kernel, row_tile=row_tile, valid_rows=rows,
                               needs_mask=needs_mask)

    partials = pl.pallas_call(
        kernel,
        out_shape=jax.ShapeDtypeStruct((num_blocks * 8, _LANES), jnp.float32),
        grid_spec=pltpu.PrefetchScalarGridSpec(
            num_scalar_prefetch=0,
            grid=(num_blocks,),
            in_specs=[
                pl.BlockSpec((row_tile, _LANES), lambda i: (i, 0)),
                pl.BlockSpec((row_tile, _LANES), lambda i: (i, 0)),
            ],
            out_specs=pl.BlockSpec((8, _LANES), lambda i: (i, 0)),
        ),
        compiler_params=pltpu.CompilerParams(
            dimension_semantics=("parallel",)),
        cost_estimate=pl.CostEstimate(
            flops=6 * n,
            transcendentals=n,
            bytes_accessed=2 * n * itemsize + num_blocks * 8 * _LANES * 4),
    )(zm, zs)

    # Tiny final reduction (num_blocks*8 x 128 elements) + 0.5 scale in the wrapper.
    return 0.5 * (jnp.sum(partials) + tail)


if __name__ == "__main__":
    key = jax.random.PRNGKey(0)
    k1, k2 = jax.random.split(key)
    # Small shapes consistent with the module's "all dimensions of input".
    z_mean = jax.random.normal(k1, (2, 4, 16, 16), dtype=jnp.float32)
    z_log_sigma = 0.1 * jax.random.normal(k2, (2, 4, 16, 16), dtype=jnp.float32)

    kl = kl_divergence(z_mean, z_log_sigma)
    jax.block_until_ready(kl)

    # Pure-JAX reference check.
    ref = 0.5 * _kl_sum_ref(z_mean, z_log_sigma)
    assert jnp.allclose(kl, ref, rtol=1e-5, atol=1e-5), (kl, ref)
    print("KERNEL_OK")
</pallas_src>

<mosaic_0001>
module attributes {stable_mosaic.version = 11 : i64} {
  func.func @_kl_kernel(%arg0: i32, %arg1: memref<16x128xf32, #tpu.memory_space<vmem>>, %arg2: memref<16x128xf32, #tpu.memory_space<vmem>>, %arg3: memref<8x128xf32, #tpu.memory_space<vmem>>) attributes {dimension_semantics = [#tpu.dimension_semantics<parallel>], iteration_bounds = array<i64: 1>, scalar_prefetch = 0 : i64, scratch_operands = 0 : i64, tpu.core_type = #tpu.core_type<tc>, window_params = [{transform_indices = @transform_0, window_bounds = array<i64: 16, 128>}, {transform_indices = @transform_1, window_bounds = array<i64: 16, 128>}, {transform_indices = @transform_2, window_bounds = array<i64: 8, 128>}]} {
    %c0 = arith.constant 0 : index
    %c0_0 = arith.constant 0 : index
    %0 = vector.load %arg1[%c0, %c0_0] : memref<16x128xf32, #tpu.memory_space<vmem>>, vector<16x128xf32>
    %c0_1 = arith.constant 0 : index
    %c0_2 = arith.constant 0 : index
    %1 = vector.load %arg2[%c0_1, %c0_2] : memref<16x128xf32, #tpu.memory_space<vmem>>, vector<16x128xf32>
    %cst = arith.constant 2.000000e+00 : f32
    %2 = vector.broadcast %cst : f32 to vector<16x128xf32>
    %3 = arith.mulf %1, %2 : vector<16x128xf32>
    %4 = arith.mulf %0, %0 : vector<16x128xf32>
    %5 = math.exp %3 : vector<16x128xf32>
    %6 = arith.addf %4, %5 : vector<16x128xf32>
    %7 = arith.subf %6, %3 : vector<16x128xf32>
    %cst_3 = arith.constant 1.000000e+00 : f32
    %8 = vector.broadcast %cst_3 : f32 to vector<16x128xf32>
    %9 = arith.subf %7, %8 : vector<16x128xf32>
    %10 = vector.shape_cast %9 : vector<16x128xf32> to vector<2x8x128xf32>
    %cst_4 = arith.constant dense<0.000000e+00> : vector<8x128xf32>
    %11 = vector.multi_reduction <add>, %10, %cst_4 [0] : vector<2x8x128xf32> to vector<8x128xf32>
    %c0_5 = arith.constant 0 : index
    %c0_6 = arith.constant 0 : index
    %12 = vector.load %arg3[%c0_5, %c0_6] : memref<8x128xf32, #tpu.memory_space<vmem>>, vector<8x128xf32>
    tpu.vector_store %arg3[%c0_5, %c0_6], %11 {strides = array<i32>} : memref<8x128xf32, #tpu.memory_space<vmem>>, vector<8x128xf32>,
    return
  }
  func.func @transform_0(%arg0: i32) -> (i32, i32) {
    %c0_i32 = arith.constant 0 : i32
    %c0_i32_0 = arith.constant 0 : i32
    return %arg0, %c0_i32 : i32, i32
  }
  func.func @transform_1(%arg0: i32) -> (i32, i32) {
    %c0_i32 = arith.constant 0 : i32
    %c0_i32_0 = arith.constant 0 : i32
    return %arg0, %c0_i32 : i32, i32
  }
  func.func @transform_2(%arg0: i32) -> (i32, i32) {
    %c0_i32 = arith.constant 0 : i32
    %c0_i32_0 = arith.constant 0 : i32
    return %arg0, %c0_i32 : i32, i32
  }
}

</mosaic_0001>

<llo_original>
// kernel: tpu_custom_call.1
$region0: #{tpu_custom_call.1}
  #allocation0 [shape = 'u32[]', space=smem, size = 0x4, offset = 0x4, fixed_abs, tag = 'smem constant byte address 0x4 - core index']
  #allocation1 [shape = 'u32[144,128]{1,0:T(1,128)}', space=vmem, size = 0x12000, scoped, tag = 'internal scratch']
  %s0 = inlined_call_operand.hbm [shape: f32[16,128], index: 0, kind: input, shape index: {}]
  %s1 = inlined_call_operand.hbm [shape: f32[16,128], index: 1, kind: input, shape index: {}]
  %s2 = inlined_call_operand.hbm [shape: f32[8,128], index: 2, kind: output, shape index: {}]
  %s3 = sld [smem:[#allocation0]]
  $region26: #{tpu_custom_call.1} parent=0
    _
  %s5 = ssub.s32 1, %s3
  %s6 = scalar_select 0, %s5, %s3
  $region1: #{tpu_custom_call.1} parent=0
    #allocation2 [shape = 'u8[8192]{0}', space=vmem, size = 0x2000, scoped, tag = 'input window, operand 0, single buffered']
    #allocation3 [shape = 's32[1]{0}', space=sflag, size = 0x4, scoped, tag = 'scoped memory for tpu_custom_call.1']
    #allocation4 [shape = 's32[1]{0}', space=sflag, size = 0x4, scoped, tag = 'scoped memory for tpu_custom_call.1']
    #allocation5 [shape = 'u8[8192]{0}', space=vmem, size = 0x2000, scoped, tag = 'input window, operand 1, single buffered']
    #allocation6 [shape = 's32[1]{0}', space=sflag, size = 0x4, scoped, tag = 'scoped memory for tpu_custom_call.1']
    #allocation7 [shape = 'u8[4096]{0}', space=vmem, size = 0x1000, scoped, tag = 'output window, operand 0, single buffered']
    %7 = vsyncpa [#allocation3], 0
    %8 = vsyncpa [#allocation6], 0
    %9 = vsyncpa [#allocation4], 0
    // Predicated region
    $region2: #{tpu_custom_call.1} parent=1 // pred_check
      _
    $region3: #{tpu_custom_call.1} parent=1 // pred_check_branch
      %11 = sbr.rel (0) target = $region5
    $region4: #{tpu_custom_call.1} parent=1 // pred_region
      %s13 = ssub.s32 256, 256
      %14 = vsyncadd [#allocation3], %s13
      %s15 = sshll.u32 [#allocation2], 4
      %s16 = int_to_ptr.vmem [resolvable:$true] %s15
      %21 = dma.hbm_to_vmem [thread:$0]  %s0, 256, %s16, [#allocation3], 128, 128, 8
    $region5: #{tpu_custom_call.1} parent=1 // pred_fallthru
      _
    // Predicated region
    $region6: #{tpu_custom_call.1} parent=1 // pred_check
      _
    $region7: #{tpu_custom_call.1} parent=1 // pred_check_branch
      %23 = sbr.rel (0) target = $region9
    $region8: #{tpu_custom_call.1} parent=1 // pred_region
      %s25 = ssub.s32 256, 256
      %26 = vsyncadd [#allocation6], %s25
      %s27 = sshll.u32 [#allocation5], 4
      %s28 = int_to_ptr.vmem [resolvable:$true] %s27
      %33 = dma.hbm_to_vmem [thread:$0]  %s1, 256, %s28, [#allocation6], 128, 128, 8
    $region9: #{tpu_custom_call.1} parent=1 // pred_fallthru
      _
    // Predicated region
    $region10: #{tpu_custom_call.1} parent=1 // pred_check
      _
    $region11: #{tpu_custom_call.1} parent=1 // pred_check_branch
      %35 = sbr.rel (0) target = $region13
    $region12: #{tpu_custom_call.1} parent=1 // pred_region
      %36 = dma.done [#allocation3], 256
    $region13: #{tpu_custom_call.1} parent=1 // pred_fallthru
      _
    // Predicated region
    $region14: #{tpu_custom_call.1} parent=1 // pred_check
      _
    $region15: #{tpu_custom_call.1} parent=1 // pred_check_branch
      %38 = sbr.rel (0) target = $region17
    $region16: #{tpu_custom_call.1} parent=1 // pred_region
      %39 = dma.done [#allocation6], 256
    $region17: #{tpu_custom_call.1} parent=1 // pred_fallthru
      _
    %v40 = vld [vmem:[#allocation2] sm:$0xff]
    %v41 = vld [vmem:[#allocation2 + $0x8] sm:$0xff]
    %v42 = vld [vmem:[#allocation5] sm:$0xff]
    %v43 = vld [vmem:[#allocation5 + $0x8] sm:$0xff]
    %v44 = vmul.f32 %v42, 2.0
    %v45 = vmul.f32 %v43, 2.0
    %v46 = vmul.f32 %v40, %v40
    %v47 = vmul.f32 %v41, %v41
    %v48 = vmul.f32 %v44, 1.442695
    %v49 = vpow.pop %v48
    %v50 = vmul.f32 %v45, 1.442695
    %v51 = vpow.pop %v50
    %v52 = vadd.f32 %v46, %v49
    %v53 = vadd.f32 %v47, %v51
    %v54 = vsub.f32 %v52, %v44
    %v55 = vsub.f32 %v53, %v45
    %v56 = vsub.f32 %v54, 1.0
    %v57 = vsub.f32 %v55, 1.0
    %v58 = vadd.f32 %v56, %v57
    %59 = vst [vmem:[#allocation7] sm:$0xff] %v58
    // Predicated region
    $region18: #{tpu_custom_call.1} parent=1 // pred_check
      _
    $region19: #{tpu_custom_call.1} parent=1 // pred_check_branch
      %61 = sbr.rel (0) target = $region21
    $region20: #{tpu_custom_call.1} parent=1 // pred_region
      %s63 = ssub.s32 128, 128
      %64 = vsyncadd [#allocation4], %s63
      %s66 = sshll.u32 [#allocation7], 4
      %s67 = int_to_ptr.vmem [resolvable:$true] %s66
      %69 = dma.vmem_to_hbm [thread:$0]  %s67, 128, %s2, [#allocation4]
    $region21: #{tpu_custom_call.1} parent=1 // pred_fallthru
      _
    // Predicated region
    $region22: #{tpu_custom_call.1} parent=1 // pred_check
      _
    $region23: #{tpu_custom_call.1} parent=1 // pred_check_branch
      %71 = sbr.rel (0) target = $region25
    $region24: #{tpu_custom_call.1} parent=1 // pred_region
      %72 = dma.done [#allocation4], 128
    $region25: #{tpu_custom_call.1} parent=1 // pred_fallthru
      _
    %73 = vsyncpa [#allocation3], 1
    %74 = vsyncpa [#allocation6], 1
    %75 = vsyncpa [#allocation4], 1

</llo_original>
